<compile_context>
chip_gen: v6e
topology: v6e:2x2x1
jax: 0.10.0
libtpu: 0.0.40
codegen_flags: <defaults>
</compile_context>

<pallas_src>
import functools

import jax
import jax.numpy as jnp
from jax.experimental import pallas as pl
from jax.experimental.pallas import tpu as pltpu


# --------------------------------------------------------------------------------------
# Kernel
# --------------------------------------------------------------------------------------
def _classifier_kernel(enc_ref, extras_ref, w1p_ref, w_ext_ref, bh_ref, w2_ref, b2_ref,
                       out_ref, acc_ref, *, hw, thw):
    k = pl.program_id(1)                 # reduction step over H*W tiles
    n_k = pl.num_programs(1)
    nchunks = thw // 128                 # static; thw is always a multiple of 128

    @pl.when(k == 0)
    def _():
        acc_ref[...] = jnp.zeros_like(acc_ref)

    def accumulate(masked):
        # Lane-partial accumulation: pure VPU work (1 cast + 1 add per vreg), no
        # cross-lane (XLU) reduce in the streaming loop.  `masked` is a static bool.
        acc = acc_ref[...]
        for j in range(nchunks):         # static unroll over lane-aligned 128-chunks
            chunk = enc_ref[:, :, j * 128:(j + 1) * 128].astype(jnp.float32)
            if masked:
                lane = jax.lax.broadcasted_iota(jnp.int32, chunk.shape, 2)
                chunk = jnp.where(k * thw + j * 128 + lane < hw, chunk, 0.0)
            acc = acc + chunk
        acc_ref[...] = acc

    if hw % thw != 0:
        # Ragged tail: the iota/compare/select only runs on the LAST reduction step.
        @pl.when(k == n_k - 1)
        def _():
            accumulate(True)

        @pl.when(k != n_k - 1)
        def _():
            accumulate(False)
    else:
        accumulate(False)

    # Epilogue: one cross-lane reduce + tiny MXU matmuls + store, last step only.
    @pl.when(k == n_k - 1)
    def _():
        pooled = jnp.sum(acc_ref[...], axis=-1)           # [b_tile, C]; 1/HW folded into w1p
        hidden = (jnp.dot(pooled, w1p_ref[...], preferred_element_type=jnp.float32)
                  + jnp.dot(extras_ref[...], w_ext_ref[...], preferred_element_type=jnp.float32)
                  + bh_ref[...])                          # [b_tile, num_hidden]
        hidden = jnp.maximum(hidden, 0.0)                 # ReLU
        out_ref[...] = (jnp.dot(hidden, w2_ref[...], preferred_element_type=jnp.float32)
                        + b2_ref[...]).astype(out_ref.dtype)   # [b_tile, classes]


# --------------------------------------------------------------------------------------
# Parameters (same shapes as the PyTorch module, packed for the fused kernel)
# --------------------------------------------------------------------------------------
def init_params(key, input_shape, input_blocks, num_hidden, classes):
    # TODO(synk): num_hidden=None (single-Linear classifier) variant not implemented.
    keys_order = list(input_blocks.keys())
    sum_nh = sum(input_blocks.values())
    total_input = input_shape + sum_nh

    n_extra = len(keys_order)
    k_iter = jax.random.split(key, 2 * n_extra + 4)

    # Per-key Linear(1, nh): torch weight (nh, 1), bias (nh,) -> block-diag pack.
    wpack = jnp.zeros((n_extra, sum_nh), jnp.float32)
    bpack = jnp.zeros((1, sum_nh), jnp.float32)
    off = 0
    for j, k in enumerate(keys_order):
        nh = input_blocks[k]
        w_k = 0.1 * jax.random.normal(k_iter[2 * j], (nh,), jnp.float32)
        b_k = 0.1 * jax.random.normal(k_iter[2 * j + 1], (nh,), jnp.float32)
        wpack = wpack.at[j, off:off + nh].set(w_k)
        bpack = bpack.at[0, off:off + nh].set(b_k)
        off += nh

    # classifier Linear(total_input, num_hidden)
    w1_t = 0.1 * jax.random.normal(k_iter[2 * n_extra], (total_input, num_hidden), jnp.float32)
    b1 = 0.1 * jax.random.normal(k_iter[2 * n_extra + 1], (1, num_hidden), jnp.float32)
    w1p = w1_t[:input_shape]        # acts on pooled features  [C, num_hidden]
    w1e = w1_t[input_shape:]        # acts on extra features   [sum_nh, num_hidden]

    # classifier Linear(num_hidden, classes)
    w2 = 0.1 * jax.random.normal(k_iter[2 * n_extra + 2], (num_hidden, classes), jnp.float32)
    b2 = 0.1 * jax.random.normal(k_iter[2 * n_extra + 3], (1, classes), jnp.float32)

    return {"keys": keys_order,
            "wpack": wpack, "bpack": bpack,
            "w1p": w1p, "w1e": w1e, "b1": b1,
            "w2": w2, "b2": b2,
            "classes": classes}


# --------------------------------------------------------------------------------------
# Tile selection
# --------------------------------------------------------------------------------------
def _choose_tile_hw(b_tile, c, hw, elem_bytes, *, resident_bytes=0,
                    budget_bytes=8 << 20, vmem_cap_bytes=40 << 20):
    """Lane tile (multiple of 128) for the H*W streaming axis."""
    hw_pad = ((hw + 127) // 128) * 128
    bytes_per_lane = max(1, b_tile * c * elem_bytes)

    # Budget-derived lane count; cap unroll depth / code size at 64 chunks.
    cap = (budget_bytes // bytes_per_lane) // 128 * 128
    cap = min(max(cap, 128), 64 * 128)
    # Keep contiguous strided-DMA rows >= ~1 KiB for narrow dtypes.
    floor = 512 if elem_bytes < 4 else 256
    thw = min(hw_pad, max(cap, floor))

    # Never over-subscribe VMEM: 2x double-buffered enc tile + resident acc/weights.
    afford = (max(0, vmem_cap_bytes - resident_bytes) // (2 * bytes_per_lane)) // 128 * 128
    thw = min(thw, max(afford, 128))
    # TODO(synk): if b_tile*C is so large that even thw=128 over-subscribes VMEM, tile the
    # channel axis with an extra grid dim instead of shrinking the lane tile further.
    return max(thw, 128)


# --------------------------------------------------------------------------------------
# pallas_call wrapper
# --------------------------------------------------------------------------------------
@functools.partial(jax.jit, static_argnames=("classes", "hw", "thw", "b_tile"))
def _run_pallas(enc, extras, wpack, bpack, w1p, w1e, b1, w2, b2,
                *, classes, hw, thw, b_tile):
    B, C, _ = enc.shape
    n_extra = extras.shape[1]
    num_hidden = w1p.shape[1]

    # Ahead-of-time weight folding (valid: ReLU comes after the first Linear):
    #   feat @ w1 = pooled @ w1p + (extras @ wpack + bpack) @ w1e
    #             = pooled_sum @ (w1p / HW) + extras @ (wpack @ w1e) + (bpack @ w1e + b1)
    w1p_s = (w1p * (1.0 / hw)).astype(jnp.float32)                # [C, num_hidden]
    w_ext = jnp.dot(wpack, w1e).astype(jnp.float32)               # [n_extra, num_hidden]
    bh = (jnp.dot(bpack, w1e) + b1).astype(jnp.float32)           # [1, num_hidden]

    nb = pl.cdiv(B, b_tile)
    nk = pl.cdiv(hw, thw)

    def const_spec(arr):
        n = arr.ndim
        return pl.BlockSpec(arr.shape, lambda b, k, n=n: (0,) * n)

    flops = (B * C * hw
             + 2 * B * (C * num_hidden + n_extra * num_hidden + num_hidden * classes))
    bytes_accessed = (enc.size * enc.dtype.itemsize
                      + 4 * (extras.size + w1p_s.size + w_ext.size + bh.size
                             + w2.size + b2.size + B * classes))

    kernel = functools.partial(_classifier_kernel, hw=hw, thw=thw)

    return pl.pallas_call(
        kernel,
        out_shape=jax.ShapeDtypeStruct((B, classes), jnp.float32),
        grid_spec=pltpu.PrefetchScalarGridSpec(
            num_scalar_prefetch=0,
            grid=(nb, nk),
            in_specs=[
                # encoder tile: pipelined (double-buffered) along the H*W reduction axis
                pl.BlockSpec((b_tile, C, thw), lambda b, k: (b, 0, k)),
                # per-batch extras and (folded) weights stay resident across reduction steps
                pl.BlockSpec((b_tile, n_extra), lambda b, k: (b, 0)),
                const_spec(w1p_s), const_spec(w_ext), const_spec(bh),
                const_spec(w2), const_spec(b2),
            ],
            out_specs=pl.BlockSpec((b_tile, classes), lambda b, k: (b, 0)),
            # f32 lane-partial pooled-sum accumulator (b_tile * C * 128 * 4 bytes)
            scratch_shapes=[pltpu.VMEM((b_tile, C, 128), jnp.float32)],
        ),
        compiler_params=pltpu.CompilerParams(
            dimension_semantics=("parallel", "arbitrary"),
            vmem_limit_bytes=48 * 1024 * 1024,
        ),
        cost_estimate=pl.CostEstimate(flops=flops, transcendentals=0,
                                      bytes_accessed=bytes_accessed),
    )(enc, extras, w1p_s, w_ext, bh, w2, b2)


def extra_scalar_inputs_classifier(encoder_input, scalar_inputs, params, *, tile_hw=None):
    """encoder_input: [B, C, H, W] (NCHW, any float dtype); scalar_inputs: key -> [B, 1]."""
    B, C, H, W = encoder_input.shape
    hw = H * W
    enc = encoder_input.reshape(B, C, hw)                 # native dtype; no f32 upcast
    extras = jnp.concatenate(
        [scalar_inputs[k].astype(jnp.float32) for k in params["keys"]], axis=1)  # [B, n_extra]

    # b_tile = min(B, 8) gives nb >= 2 (both v7x TensorCores used) whenever B > 8.
    # TODO(synk): for B <= 8 on v7x the single batch block leaves one TensorCore idle;
    # splitting the H*W reduction over a second "parallel" grid axis (per-core partial
    # pooled sums combined outside the kernel) would recover it.
    b_tile = B if B <= 8 else 8

    num_hidden = params["w1p"].shape[1]
    n_extra = len(params["keys"])
    classes = params["classes"]
    weight_bytes = 4 * (C * num_hidden + n_extra * num_hidden + num_hidden
                        + num_hidden * classes + classes)
    acc_bytes = b_tile * C * 128 * 4
    hw_pad = ((hw + 127) // 128) * 128

    if tile_hw is not None:
        thw = min(hw_pad, max(128, ((int(tile_hw) + 127) // 128) * 128))
    else:
        thw = _choose_tile_hw(b_tile, C, hw, enc.dtype.itemsize,
                              resident_bytes=acc_bytes + 2 * weight_bytes)
    assert thw % 128 == 0

    return _run_pallas(enc, extras,
                       params["wpack"], params["bpack"],
                       params["w1p"], params["w1e"], params["b1"],
                       params["w2"], params["b2"],
                       classes=classes, hw=hw, thw=thw, b_tile=b_tile)


# --------------------------------------------------------------------------------------
# Pure-JAX reference (mirrors the PyTorch forward)
# --------------------------------------------------------------------------------------
def _reference(encoder_input, scalar_inputs, params):
    pooled = jnp.mean(encoder_input.astype(jnp.float32), axis=(2, 3))          # [B, C]
    extras = jnp.concatenate(
        [scalar_inputs[k].astype(jnp.float32) for k in params["keys"]], axis=1)
    h_extra = extras @ params["wpack"] + params["bpack"]
    feat = jnp.concatenate([pooled, h_extra], axis=1)
    w1 = jnp.concatenate([params["w1p"], params["w1e"]], axis=0)
    hidden = jnp.maximum(feat @ w1 + params["b1"], 0.0)
    return hidden @ params["w2"] + params["b2"]


if __name__ == "__main__":
    B, C, H, W = 2, 4, 16, 16
    input_blocks = {"age": 8, "dose": 8}
    num_hidden, classes = 32, 3

    key = jax.random.PRNGKey(0)
    k_enc, k_age, k_dose, k_par = jax.random.split(key, 4)

    encoder_input = jax.random.normal(k_enc, (B, C, H, W), jnp.float32)
    scalar_inputs = {
        "age": jax.random.normal(k_age, (B, 1), jnp.float32),
        "dose": jax.random.normal(k_dose, (B, 1), jnp.float32),
    }

    params = init_params(k_par, input_shape=C, input_blocks=input_blocks,
                         num_hidden=num_hidden, classes=classes)

    ref = _reference(encoder_input, scalar_inputs, params)

    # tile_hw=128 forces a 2-step pipelined H*W reduction even at this toy size,
    # exercising the lane-partial accumulate / epilogue path; the second call uses
    # the auto-chosen (single-tile) path.
    out_tiled = jax.block_until_ready(
        extra_scalar_inputs_classifier(encoder_input, scalar_inputs, params, tile_hw=128))
    out_auto = jax.block_until_ready(
        extra_scalar_inputs_classifier(encoder_input, scalar_inputs, params))

    assert out_tiled.shape == (B, classes)
    assert jnp.allclose(out_tiled, ref, atol=1e-4, rtol=1e-4), (out_tiled, ref)
    assert jnp.allclose(out_auto, ref, atol=1e-4, rtol=1e-4), (out_auto, ref)

    print("KERNEL_OK")
</pallas_src>

<mosaic_0001>
module attributes {stable_mosaic.version = 11 : i64} {
  func.func @_classifier_kernel(%arg0: i32, %arg1: i32, %arg2: memref<2x4x128xf32, #tpu.memory_space<vmem>>, %arg3: memref<2x2xf32, #tpu.memory_space<vmem>>, %arg4: memref<4x32xf32, #tpu.memory_space<vmem>>, %arg5: memref<2x32xf32, #tpu.memory_space<vmem>>, %arg6: memref<1x32xf32, #tpu.memory_space<vmem>>, %arg7: memref<32x3xf32, #tpu.memory_space<vmem>>, %arg8: memref<1x3xf32, #tpu.memory_space<vmem>>, %arg9: memref<2x3xf32, #tpu.memory_space<vmem>>, %arg10: memref<2x4x128xf32, #tpu.memory_space<vmem>>) attributes {dimension_semantics = [#tpu.dimension_semantics<parallel>, #tpu.dimension_semantics<arbitrary>], iteration_bounds = array<i64: 1, 2>, scalar_prefetch = 0 : i64, scratch_operands = 1 : i64, tpu.core_type = #tpu.core_type<tc>, window_params = [{transform_indices = @transform_0, window_bounds = array<i64: 2, 4, 128>}, {transform_indices = @transform_1, window_bounds = array<i64: 2, 2>}, {pipeline_mode = #tpu.pipeline_mode<synchronous>, transform_indices = @transform_2, window_bounds = array<i64: 4, 32>}, {pipeline_mode = #tpu.pipeline_mode<synchronous>, transform_indices = @transform_3, window_bounds = array<i64: 2, 32>}, {pipeline_mode = #tpu.pipeline_mode<synchronous>, transform_indices = @transform_4, window_bounds = array<i64: 1, 32>}, {pipeline_mode = #tpu.pipeline_mode<synchronous>, transform_indices = @transform_5, window_bounds = array<i64: 32, 3>}, {pipeline_mode = #tpu.pipeline_mode<synchronous>, transform_indices = @transform_6, window_bounds = array<i64: 1, 3>}, {transform_indices = @transform_7, window_bounds = array<i64: 2, 3>}]} {
    %c0_i32 = arith.constant 0 : i32
    %0 = arith.cmpi eq, %arg1, %c0_i32 : i32
    %1 = arith.extui %0 : i1 to i32
    %c0_i32_0 = arith.constant 0 : i32
    %2 = arith.cmpi ne, %1, %c0_i32_0 : i32
    scf.if %2 {
      %cst = arith.constant 0.000000e+00 : f32
      %10 = vector.broadcast %cst : f32 to vector<2x4x128xf32>
      %c0_10 = arith.constant 0 : index
      %c0_11 = arith.constant 0 : index
      %c0_12 = arith.constant 0 : index
      %11 = vector.load %arg10[%c0_10, %c0_11, %c0_12] : memref<2x4x128xf32, #tpu.memory_space<vmem>>, vector<2x4x128xf32>
      tpu.vector_store %arg10[%c0_10, %c0_11, %c0_12], %10 {strides = array<i32>} : memref<2x4x128xf32, #tpu.memory_space<vmem>>, vector<2x4x128xf32>,
    } else {
    }
    %c0 = arith.constant 0 : index
    %c0_1 = arith.constant 0 : index
    %c0_2 = arith.constant 0 : index
    %3 = vector.load %arg10[%c0, %c0_1, %c0_2] : memref<2x4x128xf32, #tpu.memory_space<vmem>>, vector<2x4x128xf32>
    %c0_3 = arith.constant 0 : index
    %c0_4 = arith.constant 0 : index
    %c0_5 = arith.constant 0 : index
    %4 = vector.load %arg2[%c0_3, %c0_4, %c0_5] : memref<2x4x128xf32, #tpu.memory_space<vmem>>, vector<2x4x128xf32>
    %5 = arith.addf %3, %4 : vector<2x4x128xf32>
    %c0_6 = arith.constant 0 : index
    %c0_7 = arith.constant 0 : index
    %c0_8 = arith.constant 0 : index
    %6 = vector.load %arg10[%c0_6, %c0_7, %c0_8] : memref<2x4x128xf32, #tpu.memory_space<vmem>>, vector<2x4x128xf32>
    tpu.vector_store %arg10[%c0_6, %c0_7, %c0_8], %5 {strides = array<i32>} : memref<2x4x128xf32, #tpu.memory_space<vmem>>, vector<2x4x128xf32>,
    %c1_i32 = arith.constant 1 : i32
    %7 = arith.cmpi eq, %arg1, %c1_i32 : i32
    %8 = arith.extui %7 : i1 to i32
    %c0_i32_9 = arith.constant 0 : i32
    %9 = arith.cmpi ne, %8, %c0_i32_9 : i32
    scf.if %9 {
      %c0_10 = arith.constant 0 : index
      %c0_11 = arith.constant 0 : index
      %c0_12 = arith.constant 0 : index
      %10 = vector.load %arg10[%c0_10, %c0_11, %c0_12] : memref<2x4x128xf32, #tpu.memory_space<vmem>>, vector<2x4x128xf32>
      %cst = arith.constant dense<0.000000e+00> : vector<2x4xf32>
      %11 = vector.multi_reduction <add>, %10, %cst [2] : vector<2x4x128xf32> to vector<2x4xf32>
      %c0_13 = arith.constant 0 : index
      %c0_14 = arith.constant 0 : index
      %12 = vector.load %arg4[%c0_13, %c0_14] : memref<4x32xf32, #tpu.memory_space<vmem>>, vector<4x32xf32>
      %cst_15 = arith.constant dense<0.000000e+00> : vector<2x32xf32>
      %13 = tpu.matmul %11, %12, %cst_15 {dimension_numbers = #tpu.dot_dimension_numbers<[1], [0], [0], [1], [0, 0, 1, 1], [], []>} : vector<2x4xf32>, vector<4x32xf32>, vector<2x32xf32> -> vector<2x32xf32>
      %c0_16 = arith.constant 0 : index
      %c0_17 = arith.constant 0 : index
      %14 = vector.load %arg3[%c0_16, %c0_17] : memref<2x2xf32, #tpu.memory_space<vmem>>, vector<2x2xf32>
      %c0_18 = arith.constant 0 : index
      %c0_19 = arith.constant 0 : index
      %15 = vector.load %arg5[%c0_18, %c0_19] : memref<2x32xf32, #tpu.memory_space<vmem>>, vector<2x32xf32>
      %cst_20 = arith.constant dense<0.000000e+00> : vector<2x32xf32>
      %16 = tpu.matmul %14, %15, %cst_20 {dimension_numbers = #tpu.dot_dimension_numbers<[1], [0], [0], [1], [0, 0, 1, 1], [], []>} : vector<2x2xf32>, vector<2x32xf32>, vector<2x32xf32> -> vector<2x32xf32>
      %17 = arith.addf %13, %16 : vector<2x32xf32>
      %c0_21 = arith.constant 0 : index
      %c0_22 = arith.constant 0 : index
      %18 = vector.load %arg6[%c0_21, %c0_22] : memref<1x32xf32, #tpu.memory_space<vmem>>, vector<1x32xf32>
      %19 = vector.broadcast %18 : vector<1x32xf32> to vector<2x32xf32>
      %20 = arith.addf %17, %19 : vector<2x32xf32>
      %cst_23 = arith.constant 0.000000e+00 : f32
      %21 = vector.broadcast %cst_23 : f32 to vector<2x32xf32>
      %22 = arith.maximumf %20, %21 : vector<2x32xf32>
      %c0_24 = arith.constant 0 : index
      %c0_25 = arith.constant 0 : index
      %23 = vector.load %arg7[%c0_24, %c0_25] : memref<32x3xf32, #tpu.memory_space<vmem>>, vector<32x3xf32>
      %cst_26 = arith.constant dense<0.000000e+00> : vector<2x3xf32>
      %24 = tpu.matmul %22, %23, %cst_26 {dimension_numbers = #tpu.dot_dimension_numbers<[1], [0], [0], [1], [0, 0, 1, 1], [], []>} : vector<2x32xf32>, vector<32x3xf32>, vector<2x3xf32> -> vector<2x3xf32>
      %c0_27 = arith.constant 0 : index
      %c0_28 = arith.constant 0 : index
      %25 = vector.load %arg8[%c0_27, %c0_28] : memref<1x3xf32, #tpu.memory_space<vmem>>, vector<1x3xf32>
      %26 = vector.broadcast %25 : vector<1x3xf32> to vector<2x3xf32>
      %27 = arith.addf %24, %26 : vector<2x3xf32>
      %c0_29 = arith.constant 0 : index
      %c0_30 = arith.constant 0 : index
      %28 = vector.load %arg9[%c0_29, %c0_30] : memref<2x3xf32, #tpu.memory_space<vmem>>, vector<2x3xf32>
      tpu.vector_store %arg9[%c0_29, %c0_30], %27 {strides = array<i32>} : memref<2x3xf32, #tpu.memory_space<vmem>>, vector<2x3xf32>,
    } else {
    }
    return
  }
  func.func @transform_0(%arg0: i32, %arg1: i32) -> (i32, i32, i32) {
    %c0_i32 = arith.constant 0 : i32
    %c0_i32_0 = arith.constant 0 : i32
    return %arg0, %c0_i32, %arg1 : i32, i32, i32
  }
  func.func @transform_1(%arg0: i32, %arg1: i32) -> (i32, i32) {
    %c0_i32 = arith.constant 0 : i32
    %c0_i32_0 = arith.constant 0 : i32
    return %arg0, %c0_i32 : i32, i32
  }
  func.func @transform_2(%arg0: i32, %arg1: i32) -> (i32, i32) {
    %c0_i32 = arith.constant 0 : i32
    %c0_i32_0 = arith.constant 0 : i32
    %c0_i32_1 = arith.constant 0 : i32
    return %c0_i32, %c0_i32_0 : i32, i32
  }
  func.func @transform_3(%arg0: i32, %arg1: i32) -> (i32, i32) {
    %c0_i32 = arith.constant 0 : i32
    %c0_i32_0 = arith.constant 0 : i32
    %c0_i32_1 = arith.constant 0 : i32
    return %c0_i32, %c0_i32_0 : i32, i32
  }
  func.func @transform_4(%arg0: i32, %arg1: i32) -> (i32, i32) {
    %c0_i32 = arith.constant 0 : i32
    %c0_i32_0 = arith.constant 0 : i32
    %c0_i32_1 = arith.constant 0 : i32
    return %c0_i32, %c0_i32_0 : i32, i32
  }
  func.func @transform_5(%arg0: i32, %arg1: i32) -> (i32, i32) {
    %c0_i32 = arith.constant 0 : i32
    %c0_i32_0 = arith.constant 0 : i32
    %c0_i32_1 = arith.constant 0 : i32
    return %c0_i32, %c0_i32_0 : i32, i32
  }
  func.func @transform_6(%arg0: i32, %arg1: i32) -> (i32, i32) {
    %c0_i32 = arith.constant 0 : i32
    %c0_i32_0 = arith.constant 0 : i32
    %c0_i32_1 = arith.constant 0 : i32
    return %c0_i32, %c0_i32_0 : i32, i32
  }
  func.func @transform_7(%arg0: i32, %arg1: i32) -> (i32, i32) {
    %c0_i32 = arith.constant 0 : i32
    %c0_i32_0 = arith.constant 0 : i32
    return %arg0, %c0_i32 : i32, i32
  }
}

</mosaic_0001>

<llo_original>
// kernel: _run_pallas.1
$region0: #{_run_pallas.1}
  #allocation0 [shape = 'u32[]', space=smem, size = 0x4, offset = 0x4, fixed_abs, tag = 'smem constant byte address 0x4 - core index']
  #allocation1 [shape = 'u32[144,128]{1,0:T(1,128)}', space=vmem, size = 0x12000, scoped, tag = 'internal scratch']
  #allocation2 [shape = 'f32[2,4,128]{2,1,0:T(4,128)}', space=vmem, size = 0x1000, scoped, tag = 'scratch operand']
  %s0 = inlined_call_operand.vmem [shape: f32[2,4,256], index: 0, kind: input, shape index: {}]
  %s1 = inlined_call_operand.vmem [shape: f32[2,2], index: 1, kind: input, shape index: {}]
  %s2 = inlined_call_operand.vmem [shape: f32[4,32], index: 2, kind: input, shape index: {}]
  %s3 = inlined_call_operand.vmem [shape: f32[2,32], index: 3, kind: input, shape index: {}]
  %s4 = inlined_call_operand.vmem [shape: f32[1,32], index: 4, kind: input, shape index: {}]
  %s5 = inlined_call_operand.vmem [shape: f32[32,3], index: 5, kind: input, shape index: {}]
  %s6 = inlined_call_operand.vmem [shape: f32[1,3], index: 6, kind: input, shape index: {}]
  %s7 = inlined_call_operand.hbm [shape: f32[2,3], index: 7, kind: output, shape index: {}]
  %s8 = sld [smem:[#allocation0]]
  $region110: #{_run_pallas.1} parent=0
    _
  %s10 = ssub.s32 1, %s8
  %s11 = scalar_select 0, %s10, %s8
  $region1: #{_run_pallas.1} parent=0
    #allocation3 [shape = 'u8[8192]{0}', space=vmem, size = 0x2000, scoped, tag = 'input window, operand 0']
    #allocation4 [shape = 'u8[1024]{0}', space=vmem, size = 0x400, scoped, tag = 'output window, operand 0, single buffered']
    #allocation5 [shape = 's32[2]{0}', space=sflag, size = 0x8, scoped, tag = 'scoped memory for _run_pallas.1']
    %12 = vsyncpa [#allocation5], 0
    loop: start=0, step=1, limit=4
    $region2: #{_run_pallas.1} parent=1 // loop_pre_header
      _
    $region3: #{_run_pallas.1} parent=1 // loop_header
      %s14 = sphi 0, %s18
      %p15 = scmp.ge.s32.totalorder %s14, 4
      %s21 = sphi 0, %s33
      %s22 = sphi 0, %s29
      %s23 = sphi 0, %s21
      %s24 = sphi 0, %s22
      %s25 = sphi 0, %s23
      %s26 = sphi 0, %s24
      %s38 = sphi 0, %s40
      %s41 = sphi 0, %s38
      %s42 = sphi 0, %s41
      %s58 = sphi 0, %s42
      %s64 = sphi 0, %s66
      %s67 = sphi 0, %s64
      %s68 = sphi 0, %s67
      %s84 = sphi 0, %s68
      %s88 = sphi 0, %s88
      %s90 = sphi 0, %s88
      %s91 = sphi 0, %s90
      %s105 = sphi 0, %s91
      %s109 = sphi 0, %s109
      %s111 = sphi 0, %s109
      %s112 = sphi 0, %s111
      %s126 = sphi 0, %s112
      %s130 = sphi 0, %s130
      %s132 = sphi 0, %s130
      %s133 = sphi 0, %s132
      %s147 = sphi 0, %s133
      %s151 = sphi 0, %s151
      %s153 = sphi 0, %s151
      %s154 = sphi 0, %s153
      %s168 = sphi 0, %s154
      %s172 = sphi 0, %s172
      %s174 = sphi 0, %s172
      %s175 = sphi 0, %s174
      %s189 = sphi 0, %s175
      %s195 = sphi 0, %s197
      %s198 = sphi 0, %s195
      %s199 = sphi 0, %s198
      %s215 = sphi 0, %s199
    $region4: #{_run_pallas.1} parent=1 // loop_header_branch
      %17 = sbr.rel (%p15) target = $region8
    $region5: #{_run_pallas.1} parent=1 // loop_body
      %s19 = ssub.s32 %s14, 1
      %s20 = ssub.s32 %s14, 2
      %s27 = sadd.s32 1, %s22
      %p28 = scmp.ge.s32.totalorder %s27, 2
      %s29 = scalar_select %p28, 0, %s27
      %s30 = sadd.s32 1, %s21
      %s31 = scalar_select %p28, %s30, %s21
      %p32 = scmp.ge.s32.totalorder %s31, 1
      %s33 = scalar_select %p32, 0, %s31
      %s34 = ssub.s32 %s21, %s33
      %s35 = ssub.s32 %s22, %s29
      %s36 = sor.u32 %s34, %s35
      %p37 = scmp.eq.s32.totalorder %s36, 0
      %s39 = sadd.s32 %s38, 1
      %s40 = scalar_select %p37, %s38, %s39
      %p43 = pneg %p37
      %p44 = scmp.eq.s32.totalorder %s14, 1
      %p45 = por %p43, %p44
      %p46 = scmp.ne.s32.totalorder %s38, %s41
      %p47 = scmp.eq.s32.totalorder %s14, 0
      %p48 = por %p46, %p47
      %p49 = scmp.ne.s32.totalorder %s38, %s41
      %p50 = scmp.eq.s32.totalorder %s19, 1
      %p51 = por %p49, %p50
      %p52 = scmp.ne.s32.totalorder %s41, %s42
      %p53 = scmp.eq.s32.totalorder %s19, 0
      %p54 = por %p52, %p53
      %p55 = scmp.ne.s32.totalorder %s41, %s42
      %p56 = scmp.eq.s32.totalorder %s20, 1
      %p57 = por %p55, %p56
      %p59 = scmp.ne.s32.totalorder %s42, %s58
      %p60 = scmp.eq.s32.totalorder %s20, 0
      %p61 = por %p59, %p60
      %s62 = ssub.s32 %s21, %s33
      %p63 = scmp.eq.s32.totalorder %s62, 0
      %s65 = sadd.s32 %s64, 1
      %s66 = scalar_select %p63, %s64, %s65
      %p69 = pneg %p63
      %p70 = scmp.eq.s32.totalorder %s14, 1
      %p71 = por %p69, %p70
      %p72 = scmp.ne.s32.totalorder %s64, %s67
      %p73 = scmp.eq.s32.totalorder %s14, 0
      %p74 = por %p72, %p73
      %p75 = scmp.ne.s32.totalorder %s64, %s67
      %p76 = scmp.eq.s32.totalorder %s19, 1
      %p77 = por %p75, %p76
      %p78 = scmp.ne.s32.totalorder %s67, %s68
      %p79 = scmp.eq.s32.totalorder %s19, 0
      %p80 = por %p78, %p79
      %p81 = scmp.ne.s32.totalorder %s67, %s68
      %p82 = scmp.eq.s32.totalorder %s20, 1
      %p83 = por %p81, %p82
      %p85 = scmp.ne.s32.totalorder %s68, %s84
      %p86 = scmp.eq.s32.totalorder %s20, 0
      %p87 = por %p85, %p86
      %s89 = sadd.s32 %s88, 1
      %p92 = scmp.eq.s32.totalorder %s14, 1
      %p93 = scmp.ne.s32.totalorder %s88, %s90
      %p94 = scmp.eq.s32.totalorder %s14, 0
      %p95 = por %p93, %p94
      %p96 = scmp.ne.s32.totalorder %s88, %s90
      %p97 = scmp.eq.s32.totalorder %s19, 1
      %p98 = por %p96, %p97
      %p99 = scmp.ne.s32.totalorder %s90, %s91
      %p100 = scmp.eq.s32.totalorder %s19, 0
      %p101 = por %p99, %p100
      %p102 = scmp.ne.s32.totalorder %s90, %s91
      %p103 = scmp.eq.s32.totalorder %s20, 1
      %p104 = por %p102, %p103
      %p106 = scmp.ne.s32.totalorder %s91, %s105
      %p107 = scmp.eq.s32.totalorder %s20, 0
      %p108 = por %p106, %p107
      %s110 = sadd.s32 %s109, 1
      %p113 = scmp.eq.s32.totalorder %s14, 1
      %p114 = scmp.ne.s32.totalorder %s109, %s111
      %p115 = scmp.eq.s32.totalorder %s14, 0
      %p116 = por %p114, %p115
      %p117 = scmp.ne.s32.totalorder %s109, %s111
      %p118 = scmp.eq.s32.totalorder %s19, 1
      %p119 = por %p117, %p118
      %p120 = scmp.ne.s32.totalorder %s111, %s112
      %p121 = scmp.eq.s32.totalorder %s19, 0
      %p122 = por %p120, %p121
      %p123 = scmp.ne.s32.totalorder %s111, %s112
      %p124 = scmp.eq.s32.totalorder %s20, 1
      %p125 = por %p123, %p124
      %p127 = scmp.ne.s32.totalorder %s112, %s126
      %p128 = scmp.eq.s32.totalorder %s20, 0
      %p129 = por %p127, %p128
      %s131 = sadd.s32 %s130, 1
      %p134 = scmp.eq.s32.totalorder %s14, 1
      %p135 = scmp.ne.s32.totalorder %s130, %s132
      %p136 = scmp.eq.s32.totalorder %s14, 0
      %p137 = por %p135, %p136
      %p138 = scmp.ne.s32.totalorder %s130, %s132
      %p139 = scmp.eq.s32.totalorder %s19, 1
      %p140 = por %p138, %p139
      %p141 = scmp.ne.s32.totalorder %s132, %s133
      %p142 = scmp.eq.s32.totalorder %s19, 0
      %p143 = por %p141, %p142
      %p144 = scmp.ne.s32.totalorder %s132, %s133
      %p145 = scmp.eq.s32.totalorder %s20, 1
      %p146 = por %p144, %p145
      %p148 = scmp.ne.s32.totalorder %s133, %s147
      %p149 = scmp.eq.s32.totalorder %s20, 0
      %p150 = por %p148, %p149
      %s152 = sadd.s32 %s151, 1
      %p155 = scmp.eq.s32.totalorder %s14, 1
      %p156 = scmp.ne.s32.totalorder %s151, %s153
      %p157 = scmp.eq.s32.totalorder %s14, 0
      %p158 = por %p156, %p157
      %p159 = scmp.ne.s32.totalorder %s151, %s153
      %p160 = scmp.eq.s32.totalorder %s19, 1
      %p161 = por %p159, %p160
      %p162 = scmp.ne.s32.totalorder %s153, %s154
      %p163 = scmp.eq.s32.totalorder %s19, 0
      %p164 = por %p162, %p163
      %p165 = scmp.ne.s32.totalorder %s153, %s154
      %p166 = scmp.eq.s32.totalorder %s20, 1
      %p167 = por %p165, %p166
      %p169 = scmp.ne.s32.totalorder %s154, %s168
      %p170 = scmp.eq.s32.totalorder %s20, 0
      %p171 = por %p169, %p170
      %s173 = sadd.s32 %s172, 1
      %p176 = scmp.eq.s32.totalorder %s14, 1
      %p177 = scmp.ne.s32.totalorder %s172, %s174
      %p178 = scmp.eq.s32.totalorder %s14, 0
      %p179 = por %p177, %p178
      %p180 = scmp.ne.s32.totalorder %s172, %s174
      %p181 = scmp.eq.s32.totalorder %s19, 1
      %p182 = por %p180, %p181
      %p183 = scmp.ne.s32.totalorder %s174, %s175
      %p184 = scmp.eq.s32.totalorder %s19, 0
      %p185 = por %p183, %p184
      %p186 = scmp.ne.s32.totalorder %s174, %s175
      %p187 = scmp.eq.s32.totalorder %s20, 1
      %p188 = por %p186, %p187
      %p190 = scmp.ne.s32.totalorder %s175, %s189
      %p191 = scmp.eq.s32.totalorder %s20, 0
      %p192 = por %p190, %p191
      %s193 = ssub.s32 %s21, %s33
      %p194 = scmp.eq.s32.totalorder %s193, 0
      %s196 = sadd.s32 %s195, 1
      %s197 = scalar_select %p194, %s195, %s196
      %p200 = pneg %p194
      %p201 = scmp.eq.s32.totalorder %s14, 1
      %p202 = por %p200, %p201
      %p203 = scmp.ne.s32.totalorder %s195, %s198
      %p204 = scmp.eq.s32.totalorder %s14, 0
      %p205 = por %p203, %p204
      %p206 = scmp.ne.s32.totalorder %s195, %s198
      %p207 = scmp.eq.s32.totalorder %s19, 1
      %p208 = por %p206, %p207
      %p209 = scmp.ne.s32.totalorder %s198, %s199
      %p210 = scmp.eq.s32.totalorder %s19, 0
      %p211 = por %p209, %p210
      %p212 = scmp.ne.s32.totalorder %s198, %s199
      %p213 = scmp.eq.s32.totalorder %s20, 1
      %p214 = por %p212, %p213
      %p216 = scmp.ne.s32.totalorder %s199, %s215
      %p217 = scmp.eq.s32.totalorder %s20, 0
      %p218 = por %p216, %p217
      %p219 = scmp.le.s32.totalorder 1, %s14
      %p220 = scmp.lt.s32.totalorder %s14, 3
      %p221 = pnand %p219, %p220
      %p222 = pneg %p221
      // Predicated region
      $region9: #{_run_pallas.1} parent=5 // pred_check
        _
      $region10: #{_run_pallas.1} parent=5 // pred_check_branch
        %224 = sbr.rel (%p221) target = $region12
      $region11: #{_run_pallas.1} parent=5 // pred_region
        %s225 = ssub.s32 %s14, 1
        // Predicated region
        $region13: #{_run_pallas.1} parent=11 // pred_check
          %p226 = pneg %p80
        $region14: #{_run_pallas.1} parent=11 // pred_check_branch
          %228 = sbr.rel (%p226) target = $region16
        $region15: #{_run_pallas.1} parent=11 // pred_region
          %p229 = scmp.lt.s32.totalorder %s23, 0
          %s230 = scalar_select %p229, %s23, 0
          %s231 = smul.addr %s230, 2
          %s232 = scalar_lea.vmem %s1, %s231
        $region16: #{_run_pallas.1} parent=11 // pred_fallthru
          _
        // Predicated region
        $region17: #{_run_pallas.1} parent=11 // pred_check
          %p233 = pneg %p101
        $region18: #{_run_pallas.1} parent=11 // pred_check_branch
          %235 = sbr.rel (%p233) target = $region20
        $region19: #{_run_pallas.1} parent=11 // pred_region
          _
        $region20: #{_run_pallas.1} parent=11 // pred_fallthru
          _
        // Predicated region
        $region21: #{_run_pallas.1} parent=11 // pred_check
          %p236 = pneg %p122
        $region22: #{_run_pallas.1} parent=11 // pred_check_branch
          %238 = sbr.rel (%p236) target = $region24
        $region23: #{_run_pallas.1} parent=11 // pred_region
          _
        $region24: #{_run_pallas.1} parent=11 // pred_fallthru
          _
        // Predicated region
        $region25: #{_run_pallas.1} parent=11 // pred_check
          %p239 = pneg %p143
        $region26: #{_run_pallas.1} parent=11 // pred_check_branch
          %241 = sbr.rel (%p239) target = $region28
        $region27: #{_run_pallas.1} parent=11 // pred_region
          _
        $region28: #{_run_pallas.1} parent=11 // pred_fallthru
          _
        // Predicated region
        $region29: #{_run_pallas.1} parent=11 // pred_check
          %p242 = pneg %p164
        $region30: #{_run_pallas.1} parent=11 // pred_check_branch
          %244 = sbr.rel (%p242) target = $region32
        $region31: #{_run_pallas.1} parent=11 // pred_region
          _
        $region32: #{_run_pallas.1} parent=11 // pred_fallthru
          _
        // Predicated region
        $region33: #{_run_pallas.1} parent=11 // pred_check
          %p245 = pneg %p185
        $region34: #{_run_pallas.1} parent=11 // pred_check_branch
          %247 = sbr.rel (%p245) target = $region36
        $region35: #{_run_pallas.1} parent=11 // pred_region
          _
        $region36: #{_run_pallas.1} parent=11 // pred_fallthru
          _
      $region12: #{_run_pallas.1} parent=5 // pred_fallthru
        _
      %p248 = scmp.lt.s32.totalorder %s14, 2
      // Predicated region
      $region37: #{_run_pallas.1} parent=5 // pred_check
        %p249 = pneg %p248
      $region38: #{_run_pallas.1} parent=5 // pred_check_branch
        %251 = sbr.rel (%p249) target = $region40
      $region39: #{_run_pallas.1} parent=5 // pred_region
        // Predicated region
        $region41: #{_run_pallas.1} parent=39 // pred_check
          %p252 = pneg %p48
        $region42: #{_run_pallas.1} parent=39 // pred_check_branch
          %254 = sbr.rel (%p252) target = $region44
        $region43: #{_run_pallas.1} parent=39 // pred_region
          %s255 = sand.u32 %s38, 1
          %s256 = sand.u32 %s38, 1
          %s257 = smul.addr %s256, 8
          %s258 = scalar_lea.vmem [#allocation3], %s257
          %s259 = smul.u32 2, %s21
          %s260 = smul.addr %s259, 2
          %s261 = sadd.s32 %s22, %s260
          %s262 = smul.addr %s261, 4
          %s263 = scalar_lea.vmem %s0, %s262
          // Predicated region
          $region45: #{_run_pallas.1} parent=43 // pred_check
            _
          $region46: #{_run_pallas.1} parent=43 // pred_check_branch
            %265 = sbr.rel (0) target = $region48
          $region47: #{_run_pallas.1} parent=43 // pred_region
            // Predicated region
            $region49: #{_run_pallas.1} parent=47 // pred_check
              _
            $region50: #{_run_pallas.1} parent=47 // pred_check_branch
              %267 = sbr.rel target = $region52
            $region51: #{_run_pallas.1} parent=47 // pred_region
              // Predicated region
              $region64: #{_run_pallas.1} parent=51 // pred_check
                _
              $region65: #{_run_pallas.1} parent=51 // pred_check_branch
                %285 = sbr.rel (0) target = $region67
              $region66: #{_run_pallas.1} parent=51 // pred_region
                loop: start=0, step=1, limit=1
                $region68: #{_run_pallas.1} parent=66 // loop_pre_header
                  _
                $region69: #{_run_pallas.1} parent=66 // loop_header
                  %s287 = sphi 0, %s291
                  %p288 = scmp.ge.s32.totalorder %s287, 1
                  %s292 = sphi %s263, %s263
                  %s293 = sphi %s258, %s258
                $region70: #{_run_pallas.1} parent=66 // loop_header_branch
                  %290 = sbr.rel (%p288) target = $region74
                $region71: #{_run_pallas.1} parent=66 // loop_body
                  _
                $region72: #{_run_pallas.1} parent=66 // loop_footer
                  %s291 = sadd.s32 1, %s287
                $region73: #{_run_pallas.1} parent=66 // loop_footer_branch
                  %286 = sbr.rel target = $region69
                $region74: #{_run_pallas.1} parent=66 // loop_exit
                  _
                %s295 = ssub.s32 16, 1
                loop: start=0, step=1, limit=1
                $region75: #{_run_pallas.1} parent=66 // loop_pre_header
                  _
                $region76: #{_run_pallas.1} parent=66 // loop_header
                  %s297 = sphi 0, %s301
                  %p298 = scmp.ge.s32.totalorder %s297, 1
                  %s302 = sphi %s263, %s263
                  %s303 = sphi %s258, %s258
                $region77: #{_run_pallas.1} parent=66 // loop_header_branch
                  %300 = sbr.rel (%p298) target = $region81
                $region78: #{_run_pallas.1} parent=66 // loop_body
                  %v304 = vld [vmem:[%s302] sm:%s295]
                  %305 = vst [vmem:[%s303] sm:%s295] %v304
                  %v306 = vld [vmem:[%s302 + $0x8] sm:%s295]
                  %307 = vst [vmem:[%s303 + $0x4] sm:%s295] %v306
                $region79: #{_run_pallas.1} parent=66 // loop_footer
                  %s301 = sadd.s32 1, %s297
                $region80: #{_run_pallas.1} parent=66 // loop_footer_branch
                  %296 = sbr.rel target = $region76
                $region81: #{_run_pallas.1} parent=66 // loop_exit
                  _
              $region67: #{_run_pallas.1} parent=51 // pred_fallthru
                _
            $region52: #{_run_pallas.1} parent=47 // pred_fallthru
              _
            // Predicated region
            $region53: #{_run_pallas.1} parent=47 // pred_check
              _
            $region54: #{_run_pallas.1} parent=47 // pred_check_branch
              %269 = sbr.rel (0) target = $region56
            $region55: #{_run_pallas.1} parent=47 // pred_region
              %s271 = ssub.s32 16, 1
              loop: start=0, step=1, limit=1
              $region57: #{_run_pallas.1} parent=55 // loop_pre_header
                _
              $region58: #{_run_pallas.1} parent=55 // loop_header
                %s273 = sphi 0, %s277
                %p274 = scmp.ge.s32.totalorder %s273, 1
                %s278 = sphi %s263, %s263
                %s279 = sphi %s258, %s258
              $region59: #{_run_pallas.1} parent=55 // loop_header_branch
                %276 = sbr.rel (%p274) target = $region63
              $region60: #{_run_pallas.1} parent=55 // loop_body
                %v280 = vld [vmem:[%s278] sm:%s271]
                %281 = vst [vmem:[%s279] sm:%s271] %v280
                %v282 = vld [vmem:[%s278 + $0x8] sm:%s271]
                %283 = vst [vmem:[%s279 + $0x4] sm:%s271] %v282
              $region61: #{_run_pallas.1} parent=55 // loop_footer
                %s277 = sadd.s32 1, %s273
              $region62: #{_run_pallas.1} parent=55 // loop_footer_branch
                %272 = sbr.rel target = $region58
              $region63: #{_run_pallas.1} parent=55 // loop_exit
                _
            $region56: #{_run_pallas.1} parent=47 // pred_fallthru
              _
          $region48: #{_run_pallas.1} parent=43 // pred_fallthru
            _
          %308 = vnop
        $region44: #{_run_pallas.1} parent=39 // pred_fallthru
          _
      $region40: #{_run_pallas.1} parent=5 // pred_fallthru
        _
      %p309 = scmp.le.s32.totalorder 1, %s14
      %p310 = scmp.lt.s32.totalorder %s14, 3
      %p311 = pnand %p309, %p310
      %p312 = pneg %p311
      // Predicated region
      $region82: #{_run_pallas.1} parent=5 // pred_check
        _
      $region83: #{_run_pallas.1} parent=5 // pred_check_branch
        %314 = sbr.rel (%p311) target = $region85
      $region84: #{_run_pallas.1} parent=5 // pred_region
        %s315 = ssub.s32 %s14, 1
        %s316 = sand.u32 %s41, 1
        %s317 = sand.u32 %s41, 1
        %s318 = smul.addr %s317, 8
        %s319 = scalar_lea.vmem [#allocation3], %s318
        // Predicated region
        $region86: #{_run_pallas.1} parent=84 // pred_check
          %p320 = pneg %p54
        $region87: #{_run_pallas.1} parent=84 // pred_check_branch
          %322 = sbr.rel (%p320) target = $region89
        $region88: #{_run_pallas.1} parent=84 // pred_region
          _
        $region89: #{_run_pallas.1} parent=84 // pred_fallthru
          _
        %s323 = sand.u32 %s41, 1
        %s324 = sand.u32 %s41, 1
        %s325 = smul.addr %s324, 8
        %s326 = scalar_lea.vmem [#allocation3], %s325
        %p327 = pneg %p54
        %p328 = pneg %p51
        %p329 = scmp.lt.s32.totalorder %s23, 0
        %s330 = scalar_select %p329, %s23, 0
        %s331 = smul.addr %s330, 2
        %s332 = scalar_lea.vmem %s1, %s331
        %p333 = pneg %p80
        %p334 = pneg %p77
        %p335 = pneg %p101
        %p336 = pneg %p98
        %p337 = pneg %p122
        %p338 = pneg %p119
        %p339 = pneg %p143
        %p340 = pneg %p140
        %p341 = pneg %p164
        %p342 = pneg %p161
        %p343 = pneg %p185
        %p344 = pneg %p182
        %p345 = pneg %p211
        %p346 = pneg %p208
        %s347 = smul.u32 2, %s23
        %p348 = scmp.lt.s32.totalorder %s23, 0
        %s349 = scalar_select %p348, %s23, 0
        %s350 = smul.addr %s349, 2
        %s351 = scalar_lea.vmem %s1, %s350
        %p352 = scmp.eq.s32.totalorder %s24, 0
        // Predicated region
        $region90: #{_run_pallas.1} parent=84 // pred_check
          %p353 = pneg %p352
        $region91: #{_run_pallas.1} parent=84 // pred_check_branch
          %355 = sbr.rel (%p353) target = $region93
        $region92: #{_run_pallas.1} parent=84 // pred_region
          %356 = vst [vmem:[#allocation2] sm:$0xf] 0.0
          %357 = vst [vmem:[#allocation2 + $0x4] sm:$0xf] 0.0
        $region93: #{_run_pallas.1} parent=84 // pred_fallthru
          _
        %v358 = vld [vmem:[#allocation2] sm:$0xf]
        %v359 = vld [vmem:[#allocation2 + $0x4] sm:$0xf]
        %v360 = vld [vmem:[%s319] sm:$0xf]
        %v361 = vld [vmem:[%s319 + $0x4] sm:$0xf]
        %v362 = vadd.f32 %v358, %v360
        %v363 = vadd.f32 %v359, %v361
        %364 = vst [vmem:[#allocation2] sm:$0xf] %v362
        %365 = vst [vmem:[#allocation2 + $0x4] sm:$0xf] %v363
        %p366 = scmp.eq.s32.totalorder %s24, 1
        // Predicated region
        $region94: #{_run_pallas.1} parent=84 // pred_check
          %p367 = pneg %p366
        $region95: #{_run_pallas.1} parent=84 // pred_check_branch
          %369 = sbr.rel (%p367) target = $region97
        $region96: #{_run_pallas.1} parent=84 // pred_region
          %v370 = vld [vmem:[#allocation2] sm:$0xf]
          %v371 = vld [vmem:[#allocation2 + $0x4] sm:$0xf]
          %vm372 = vcmask 1043456
          %v373 = vsel %vm372, %v370, 0.0
          %374 = vadd.xlane.f32.xlu0 %v373
          %v375 = vpop.xlane.xlu0 %374
          %v376 = vsel %vm372, %v371, 0.0
          %377 = vadd.xlane.f32.xlu0 %v376
          %v378 = vpop.xlane.xlu0 %377
          %v379 = vld [vmem:[%s2] sm:$0xf]
          %v380 = vld [vmem:[%s351] sm:$0x3]
          %v381 = vld [vmem:[%s3] sm:$0x3]
          %vm382 = vcmask 15360
          %v384 = vsel %vm382, %v380, 0
          %vm386 = vcmask 1041408
          %v388 = vsel %vm386, %v381, 0
          %390 = vmatprep.subr.mxu0 0.0
          %391 = vmatpush1.msra.mxu0 0.0
          %392 = vmatprep.subr.mxu0 0.0
          %393 = vmatpush1.msra.mxu0 0.0
          %394 = vmatprep.subr.mxu0 0.0
          %395 = vmatpush1.msra.mxu0 0.0
          %396 = vmatprep.subr.mxu0 0.0
          %397 = vmatpush1.msra.mxu0 0.0
          %398 = vmatprep.subr.mxu0 0.0
          %399 = vmatpush1.msra.mxu0 0.0
          %400 = vmatprep.subr.mxu0 0.0
          %401 = vmatpush1.msra.mxu0 0.0
          %402 = vmatprep.subr.mxu0 0.0
          %403 = vmatpush1.msra.mxu0 0.0
          %404 = vmatprep.subr.mxu0 0.0
          %405 = vmatpush1.msra.mxu0 0.0
          %406 = vmatprep.subr.mxu0 0.0
          %407 = vmatpush1.msra.mxu0 0.0
          %408 = vmatprep.subr.mxu0 0.0
          %409 = vmatpush1.msra.mxu0 0.0
          %410 = vmatprep.subr.mxu0 0.0
          %411 = vmatpush1.msra.mxu0 0.0
          %412 = vmatprep.subr.mxu0 0.0
          %413 = vmatpush1.msra.mxu0 0.0
          %414 = vmatprep.subr.mxu0 0.0
          %415 = vmatpush1.msra.mxu0 0.0
          %416 = vmatprep.subr.mxu0 0.0
          %417 = vmatpush1.msra.mxu0 0.0
          %418 = vmatprep.subr.mxu0 0.0
          %419 = vmatpush1.msra.mxu0 0.0
          %420 = vmatprep.subr.mxu0 0.0
          %421 = vmatpush1.msra.mxu0 %v388
          %422 = vmatprep.subr.mxu0 0.0
          %423 = vmatpush2.msra.mxu0 0.0
          %424 = vmatprep.subr.mxu0 0.0
          %425 = vmatpush2.msra.mxu0 0.0
          %426 = vmatprep.subr.mxu0 0.0
          %427 = vmatpush2.msra.mxu0 0.0
          %428 = vmatprep.subr.mxu0 0.0
          %429 = vmatpush2.msra.mxu0 0.0
          %430 = vmatprep.subr.mxu0 0.0
          %431 = vmatpush2.msra.mxu0 0.0
          %432 = vmatprep.subr.mxu0 0.0
          %433 = vmatpush2.msra.mxu0 0.0
          %434 = vmatprep.subr.mxu0 0.0
          %435 = vmatpush2.msra.mxu0 0.0
          %436 = vmatprep.subr.mxu0 0.0
          %437 = vmatpush2.msra.mxu0 0.0
          %438 = vmatprep.subr.mxu0 0.0
          %439 = vmatpush2.msra.mxu0 0.0
          %440 = vmatprep.subr.mxu0 0.0
          %441 = vmatpush2.msra.mxu0 0.0
          %442 = vmatprep.subr.mxu0 0.0
          %443 = vmatpush2.msra.mxu0 0.0
          %444 = vmatprep.subr.mxu0 0.0
          %445 = vmatpush2.msra.mxu0 0.0
          %446 = vmatprep.subr.mxu0 0.0
          %447 = vmatpush2.msra.mxu0 0.0
          %448 = vmatprep.subr.mxu0 0.0
          %449 = vmatpush2.msra.mxu0 0.0
          %450 = vmatprep.subr.mxu0 0.0
          %451 = vmatpush2.msra.mxu0 0.0
          %452 = vmatprep.subr.mxu0 0.0
          %453 = vmatpush2.msra.mxu0 0.0
          %454 = vmatprep.mubr.f32.mxu0 0.0
          %455 = vmatmul.mubr.f32.gmra.mxu0 %v384
          %v456 = vpop.f32.mrf.mxu0
          %v457 = vadd.f32 0.0, %v456
          %v458 = vpop.f32.mrf.mxu0
          %459 = vdwg.mxu0
          %v462 = vlaneseq
          %v463 = vand.u32 %v462, 127
          %v464 = vlaneseq
          %v465 = vshrl.u32 %v464, 7
          %v466 = vsub.s32 %v463, %v465
          %v467 = vrot.slane %v375, %v466
          %v468 = vlaneseq
          %v469 = vshrl.u32 %v468, 7
          %v470 = vsub.s32 %v463, %v469
          %v471 = vrot.slane %v378, %v470
          %vm472 = vcmask 1041409
          %v473 = vsel %vm472, %v471, %v467
          %vm474 = vcmask 31744
          %v475 = vsel %vm474, %v473, 0
          %v478 = vsel %vm372, %v379, 0
          %480 = vmatprep.subr.mxu0 0.0
          %481 = vmatpush1.msra.mxu0 0.0
          %482 = vmatprep.subr.mxu0 0.0
          %483 = vmatpush1.msra.mxu0 0.0
          %484 = vmatprep.subr.mxu0 0.0
          %485 = vmatpush1.msra.mxu0 0.0
          %486 = vmatprep.subr.mxu0 0.0
          %487 = vmatpush1.msra.mxu0 0.0
          %488 = vmatprep.subr.mxu0 0.0
          %489 = vmatpush1.msra.mxu0 0.0
          %490 = vmatprep.subr.mxu0 0.0
          %491 = vmatpush1.msra.mxu0 0.0
          %492 = vmatprep.subr.mxu0 0.0
          %493 = vmatpush1.msra.mxu0 0.0
          %494 = vmatprep.subr.mxu0 0.0
          %495 = vmatpush1.msra.mxu0 0.0
          %496 = vmatprep.subr.mxu0 0.0
          %497 = vmatpush1.msra.mxu0 0.0
          %498 = vmatprep.subr.mxu0 0.0
          %499 = vmatpush1.msra.mxu0 0.0
          %500 = vmatprep.subr.mxu0 0.0
          %501 = vmatpush1.msra.mxu0 0.0
          %502 = vmatprep.subr.mxu0 0.0
          %503 = vmatpush1.msra.mxu0 0.0
          %504 = vmatprep.subr.mxu0 0.0
          %505 = vmatpush1.msra.mxu0 0.0
          %506 = vmatprep.subr.mxu0 0.0
          %507 = vmatpush1.msra.mxu0 0.0
          %508 = vmatprep.subr.mxu0 0.0
          %509 = vmatpush1.msra.mxu0 0.0
          %510 = vmatprep.subr.mxu0 0.0
          %511 = vmatpush1.msra.mxu0 %v478
          %512 = vmatprep.subr.mxu0 0.0
          %513 = vmatpush2.msra.mxu0 0.0
          %514 = vmatprep.subr.mxu0 0.0
          %515 = vmatpush2.msra.mxu0 0.0
          %516 = vmatprep.subr.mxu0 0.0
          %517 = vmatpush2.msra.mxu0 0.0
          %518 = vmatprep.subr.mxu0 0.0
          %519 = vmatpush2.msra.mxu0 0.0
          %520 = vmatprep.subr.mxu0 0.0
          %521 = vmatpush2.msra.mxu0 0.0
          %522 = vmatprep.subr.mxu0 0.0
          %523 = vmatpush2.msra.mxu0 0.0
          %524 = vmatprep.subr.mxu0 0.0
          %525 = vmatpush2.msra.mxu0 0.0
          %526 = vmatprep.subr.mxu0 0.0
          %527 = vmatpush2.msra.mxu0 0.0
          %528 = vmatprep.subr.mxu0 0.0
          %529 = vmatpush2.msra.mxu0 0.0
          %530 = vmatprep.subr.mxu0 0.0
          %531 = vmatpush2.msra.mxu0 0.0
          %532 = vmatprep.subr.mxu0 0.0
          %533 = vmatpush2.msra.mxu0 0.0
          %534 = vmatprep.subr.mxu0 0.0
          %535 = vmatpush2.msra.mxu0 0.0
          %536 = vmatprep.subr.mxu0 0.0
          %537 = vmatpush2.msra.mxu0 0.0
          %538 = vmatprep.subr.mxu0 0.0
          %539 = vmatpush2.msra.mxu0 0.0
          %540 = vmatprep.subr.mxu0 0.0
          %541 = vmatpush2.msra.mxu0 0.0
          %542 = vmatprep.subr.mxu0 0.0
          %543 = vmatpush2.msra.mxu0 0.0
          %544 = vmatprep.mubr.f32.mxu0 0.0
          %545 = vmatmul.mubr.f32.gmra.mxu0 %v475
          %v546 = vpop.f32.mrf.mxu0
          %v547 = vadd.f32 %v457, %v546
          %v548 = vpop.f32.mrf.mxu0
          %549 = vdwg.mxu0
          %v550 = vld [vmem:[%s4] sm:$0x1]
          %v552 = vlaneseq
          %v553 = vshrl.u32 %v552, 7
          %v554 = vsub.s32 0, %v553
          %v555 = vrot.slane %v550, %v554
          %v557 = vadd.f32 %v547, %v555
          %v558 = vmax.f32 %v557, 0.0
          %v559 = vld [vmem:[%s5] sm:$0xff]
          %v560 = vld [vmem:[%s5 + $0x8] sm:$0xff]
          %v561 = vld [vmem:[%s5 + $0x10] sm:$0xff]
          %v562 = vld [vmem:[%s5 + $0x18] sm:$0xff]
          %v563 = vld [vmem:[%s6] sm:$0x1]
          %v565 = vlaneseq
          %v566 = vshrl.u32 %v565, 7
          %v567 = vsub.s32 0, %v566
          %v568 = vrot.slane %v563, %v567
          %vm570 = vcmask 261120
          %v572 = vsel %vm570, %v558, 0
          %574 = vmatprep.subr.mxu0 0.0
          %575 = vmatpush1.msra.mxu0 0.0
          %576 = vmatprep.subr.mxu0 0.0
          %577 = vmatpush1.msra.mxu0 0.0
          %578 = vmatprep.subr.mxu0 0.0
          %579 = vmatpush1.msra.mxu0 0.0
          %580 = vmatprep.subr.mxu0 0.0
          %581 = vmatpush1.msra.mxu0 0.0
          %582 = vmatprep.subr.mxu0 0.0
          %583 = vmatpush1.msra.mxu0 0.0
          %584 = vmatprep.subr.mxu0 0.0
          %585 = vmatpush1.msra.mxu0 0.0
          %586 = vmatprep.subr.mxu0 0.0
          %587 = vmatpush1.msra.mxu0 0.0
          %588 = vmatprep.subr.mxu0 0.0
          %589 = vmatpush1.msra.mxu0 0.0
          %590 = vmatprep.subr.mxu0 0.0
          %591 = vmatpush1.msra.mxu0 0.0
          %592 = vmatprep.subr.mxu0 0.0
          %593 = vmatpush1.msra.mxu0 0.0
          %594 = vmatprep.subr.mxu0 0.0
          %595 = vmatpush1.msra.mxu0 0.0
          %596 = vmatprep.subr.mxu0 0.0
          %597 = vmatpush1.msra.mxu0 0.0
          %598 = vmatprep.subr.mxu0 0.0
          %599 = vmatpush1.msra.mxu0 %v562
          %600 = vmatprep.subr.mxu0 0.0
          %601 = vmatpush1.msra.mxu0 %v561
          %602 = vmatprep.subr.mxu0 0.0
          %603 = vmatpush1.msra.mxu0 %v560
          %604 = vmatprep.subr.mxu0 0.0
          %605 = vmatpush1.msra.mxu0 %v559
          %606 = vmatprep.subr.mxu0 0.0
          %607 = vmatpush2.msra.mxu0 0.0
          %608 = vmatprep.subr.mxu0 0.0
          %609 = vmatpush2.msra.mxu0 0.0
          %610 = vmatprep.subr.mxu0 0.0
          %611 = vmatpush2.msra.mxu0 0.0
          %612 = vmatprep.subr.mxu0 0.0
          %613 = vmatpush2.msra.mxu0 0.0
          %614 = vmatprep.subr.mxu0 0.0
          %615 = vmatpush2.msra.mxu0 0.0
          %616 = vmatprep.subr.mxu0 0.0
          %617 = vmatpush2.msra.mxu0 0.0
          %618 = vmatprep.subr.mxu0 0.0
          %619 = vmatpush2.msra.mxu0 0.0
          %620 = vmatprep.subr.mxu0 0.0
          %621 = vmatpush2.msra.mxu0 0.0
          %622 = vmatprep.subr.mxu0 0.0
          %623 = vmatpush2.msra.mxu0 0.0
          %624 = vmatprep.subr.mxu0 0.0
          %625 = vmatpush2.msra.mxu0 0.0
          %626 = vmatprep.subr.mxu0 0.0
          %627 = vmatpush2.msra.mxu0 0.0
          %628 = vmatprep.subr.mxu0 0.0
          %629 = vmatpush2.msra.mxu0 0.0
          %630 = vmatprep.subr.mxu0 0.0
          %631 = vmatpush2.msra.mxu0 0.0
          %632 = vmatprep.subr.mxu0 0.0
          %633 = vmatpush2.msra.mxu0 0.0
          %634 = vmatprep.subr.mxu0 0.0
          %635 = vmatpush2.msra.mxu0 0.0
          %636 = vmatprep.subr.mxu0 0.0
          %637 = vmatpush2.msra.mxu0 0.0
          %638 = vmatprep.mubr.f32.mxu0 0.0
          %639 = vmatmul.mubr.f32.gmra.mxu0 %v572
          %v640 = vpop.f32.mrf.mxu0
          %v641 = vadd.f32 %v568, %v640
          %v642 = vpop.f32.mrf.mxu0
          %643 = vdwg.mxu0
          %vm644 = vcmask 17408
          %645 = vst.msk [vmem:[#allocation4] sm:$0x3] %vm644, %v641
        $region97: #{_run_pallas.1} parent=84 // pred_fallthru
          _
        // Predicated region
        $region98: #{_run_pallas.1} parent=84 // pred_check
          %p646 = pneg %p208
        $region99: #{_run_pallas.1} parent=84 // pred_check_branch
          %648 = sbr.rel (%p646) target = $region101
        $region100: #{_run_pallas.1} parent=84 // pred_region
          %s650 = ssub.s32 32, 32
          %651 = vsyncadd [#allocation5], %s650
          %s652 = smul.addr %s23, 32
          %s653 = scalar_lea.hbm %s7, %s652
          %s655 = sshll.u32 [#allocation4], 4
          %s656 = int_to_ptr.vmem [resolvable:$true] %s655
          %658 = dma.vmem_to_hbm [thread:$0]  %s656, 32, %s653, [#allocation5]
        $region101: #{_run_pallas.1} parent=84 // pred_fallthru
          _
        // Predicated region
        $region102: #{_run_pallas.1} parent=84 // pred_check
          %p659 = pneg %p208
        $region103: #{_run_pallas.1} parent=84 // pred_check_branch
          %661 = sbr.rel (%p659) target = $region105
        $region104: #{_run_pallas.1} parent=84 // pred_region
          %662 = dma.done [#allocation5], 32
        $region105: #{_run_pallas.1} parent=84 // pred_fallthru
          _
      $region85: #{_run_pallas.1} parent=5 // pred_fallthru
        _
      %p663 = scmp.le.s32.totalorder 2, %s14
      // Predicated region
      $region106: #{_run_pallas.1} parent=5 // pred_check
        %p664 = pneg %p663
      $region107: #{_run_pallas.1} parent=5 // pred_check_branch
        %666 = sbr.rel (%p664) target = $region109
      $region108: #{_run_pallas.1} parent=5 // pred_region
        %s667 = ssub.s32 %s14, 2
      $region109: #{_run_pallas.1} parent=5 // pred_fallthru
        _
    $region6: #{_run_pallas.1} parent=1 // loop_footer
      %s18 = sadd.s32 1, %s14
    $region7: #{_run_pallas.1} parent=1 // loop_footer_branch
      %13 = sbr.rel target = $region3
    $region8: #{_run_pallas.1} parent=1 // loop_exit
      _
    %668 = vsyncpa [#allocation5], 1
    %s669 = scalar_lea.sflag [#allocation5], 1
    %670 = vsyncpa %s669, 1

</llo_original>
